<compile_context>
chip_gen: v5e
topology: v5e:2x2
jax: 0.10.0
libtpu: 0.0.40
codegen_flags: <defaults>
</compile_context>

<pallas_src>
import functools

import jax
import jax.numpy as jnp
from jax.experimental import pallas as pl
from jax.experimental.pallas import tpu as pltpu

LANE = 128        # TPU lane width
H1, H2 = 16, 10   # hidden sizes from the PyTorch module
NEG_SLOPE = 0.2   # PyG GATConv default LeakyReLU slope


def _round_up(v, m):
    return (v + m - 1) // m * m


# ---------------------------------------------------------------------------
# Parameter packing: one [R, 128] f32 slab, every block 8-row aligned.
# ---------------------------------------------------------------------------
def pack_params(p, input_dim):
    offs = {}
    blocks = []
    row = 0

    def add(name, a, pad_rows):
        nonlocal row
        a = jnp.asarray(a, jnp.float32)
        r, c = a.shape
        blocks.append(jnp.pad(a, ((0, pad_rows - r), (0, LANE - c))))
        offs[name] = row
        row += pad_rows

    add("w1", p["w1"], _round_up(input_dim, 8))                       # [Fin,16]
    add("a1", jnp.concatenate([p["as1"], p["ad1"], p["b1"]], 0), 8)   # rows: src,dst,bias
    add("w2", p["w2"], _round_up(H1, 8))                              # [16,10]
    add("a2", jnp.concatenate([p["as2"], p["ad2"], p["b2"]], 0), 8)   # rows: src,dst,bias
    add("wl1", p["wl1"], _round_up(H2, 8))                            # [10,10]
    tail = jnp.concatenate(
        [p["bl1"], p["wl2"].T, jnp.pad(p["bl2"], ((0, 0), (0, H2 - 1)))], 0)
    add("tail", tail, 8)                                              # rows: bl1, wl2^T, bl2
    return jnp.concatenate(blocks, axis=0), offs


# ---------------------------------------------------------------------------
# Kernel
# ---------------------------------------------------------------------------
def _gat_layer(x, mask_ref, w, att_src, att_dst, bias, agg_dtype):
    """One dense GATConv layer (heads=1)."""
    h = jnp.dot(x, w, preferred_element_type=jnp.float32)               # [N,F]  MXU
    # dst score as a column: VPU multiply + lane (XLU) reduce
    a_dst = jnp.sum(h * att_dst, axis=-1, keepdims=True)                # [N,1]
    # src score as a row [1,N]: single feature-contracting dot (avoids col->row relayout)
    a_src = jax.lax.dot_general(att_src, h, (((1,), (1,)), ((), ())),
                                preferred_element_type=jnp.float32)      # [1,N]
    e = a_dst + a_src                                                    # [N_dst, N_src]
    e = jnp.maximum(e, NEG_SLOPE * e)                                    # LeakyReLU (2 VPU ops)
    e = e + mask_ref[0]                                                  # bf16 additive mask, upcast fuses
    e = e - jnp.max(e, axis=-1, keepdims=True)
    if jnp.dtype(agg_dtype) == jnp.bfloat16:
        p = jnp.exp(e.astype(jnp.bfloat16))                              # bf16 EUP exp (v6e/v7x)
    else:
        p = jnp.exp(e)
    s = jnp.sum(p, axis=-1, keepdims=True)                               # unnormalized row sums
    out = jnp.dot(p, h.astype(agg_dtype),
                  preferred_element_type=jnp.float32)                    # aggregate (MXU)
    inv = 1.0 / s.astype(jnp.float32)                                    # exact, only N values
    return out * inv + bias                                              # fold softmax norm into output


def gat_regression_kernel(x_ref, mask_ref, p_ref, out_ref, *,
                          input_dim, offs, agg_dtype):
    # --- parameter blocks: direct ref slices (8-row-aligned starts) ---------
    def wblk(name, nrows, ncols):
        r0 = offs[name]
        return p_ref[r0:r0 + nrows, 0:ncols]

    def vec3(name, ncols):
        blk = p_ref[offs[name]:offs[name] + 8, 0:ncols]   # small aligned block
        return blk[0:1], blk[1:2], blk[2:3]               # src, dst, bias rows

    x = x_ref[0]                                           # [N, Fin]
    as1, ad1, b1 = vec3("a1", H1)
    as2, ad2, b2 = vec3("a2", H2)
    tail = p_ref[offs["tail"]:offs["tail"] + 8, 0:H2]
    bl1, wl2_row, bl2 = tail[0:1], tail[1:2], tail[2:3, 0:1]

    # conv1 (Fin -> 16) + ReLU
    h = _gat_layer(x, mask_ref, wblk("w1", input_dim, H1), as1, ad1, b1, agg_dtype)
    h = jnp.maximum(h, 0.0)
    # conv2 (16 -> 10)
    h = _gat_layer(h, mask_ref, wblk("w2", H1, H2), as2, ad2, b2, agg_dtype)
    # linear1 (10 -> 10) + ReLU
    h = jnp.dot(h, wblk("wl1", H2, H2), preferred_element_type=jnp.float32) + bl1
    h = jnp.maximum(h, 0.0)
    # linear2 (10 -> 1): VPU multiply + reduce instead of a lane-width-1 MXU dot
    y = jnp.sum(h * wl2_row, axis=-1, keepdims=True) + bl2
    # lane-dense store; the wrapper slices column 0
    out_ref[0] = jnp.broadcast_to(y, out_ref.shape[1:])


# ---------------------------------------------------------------------------
# Wrapper
# ---------------------------------------------------------------------------
def make_forward(input_dim, offs, agg_dtype=jnp.float32):
    """Batched forward: (x [G,N,Fin] f32, mask_bias [G,N,N] bf16, packed [R,128] f32) -> [G,N,1]."""
    kernel = functools.partial(gat_regression_kernel, input_dim=input_dim,
                               offs=dict(offs), agg_dtype=agg_dtype)

    @jax.jit
    def forward(x, mask_bias, packed):
        g, n, fin = x.shape
        r = packed.shape[0]
        # real footprint: double-buffered blocks + params + [N,N] f32 intermediates
        est = (2 * (n * fin * 4 + n * n * 2 + n * LANE * 4)
               + 2 * r * LANE * 4
               + 6 * n * n * 4)
        vmem_limit = int(min(64 << 20, max(32 << 20, 2 * est)))
        out = pl.pallas_call(
            kernel,
            out_shape=jax.ShapeDtypeStruct((g, n, LANE), jnp.float32),
            grid=(g,),
            in_specs=[
                pl.BlockSpec((1, n, fin), lambda i: (i, 0, 0)),
                pl.BlockSpec((1, n, n), lambda i: (i, 0, 0)),
                pl.BlockSpec((r, LANE), lambda i: (0, 0)),   # params resident
            ],
            out_specs=pl.BlockSpec((1, n, LANE), lambda i: (i, 0, 0)),
            compiler_params=pltpu.CompilerParams(
                dimension_semantics=("parallel",),
                vmem_limit_bytes=vmem_limit),
        )(x, mask_bias, packed)
        return out[:, :, :1]

    return forward


# ---------------------------------------------------------------------------
# Graph preprocessing, params, pure-JAX reference
# ---------------------------------------------------------------------------
def build_adjacency(edge_index, num_nodes):
    """Dense adj[dst, src] = 1 per edge (src -> dst), with self-loops (PyG default)."""
    src, dst = edge_index[0], edge_index[1]
    adj = jnp.zeros((num_nodes, num_nodes), jnp.float32).at[dst, src].set(1.0)
    return jnp.maximum(adj, jnp.eye(num_nodes, dtype=jnp.float32))


def build_mask_bias(adj):
    """Additive mask: 0 on edges, -1e30 elsewhere (bf16: same exponent range as f32)."""
    return jnp.where(adj > 0, 0.0, -1e30).astype(jnp.bfloat16)


def init_params(key, input_dim):
    ks = jax.random.split(key, 12)
    u = lambda k, shape, s: jax.random.uniform(k, shape, jnp.float32, -s, s)
    return {
        # GATConv(input_dim -> 16), heads=1
        "w1":  u(ks[0], (input_dim, H1), 0.3),   # stored as [Fin, Fout] = W^T
        "as1": u(ks[1], (1, H1), 0.3),
        "ad1": u(ks[2], (1, H1), 0.3),
        "b1":  u(ks[3], (1, H1), 0.1),
        # GATConv(16 -> 10), heads=1
        "w2":  u(ks[4], (H1, H2), 0.3),
        "as2": u(ks[5], (1, H2), 0.3),
        "ad2": u(ks[6], (1, H2), 0.3),
        "b2":  u(ks[7], (1, H2), 0.1),
        # Linear(10 -> 10)
        "wl1": u(ks[8], (H2, H2), 0.3),
        "bl1": u(ks[9], (1, H2), 0.1),
        # Linear(10 -> 1)
        "wl2": u(ks[10], (H2, 1), 0.3),
        "bl2": u(ks[11], (1, 1), 0.1),
    }


def reference_forward(x, adj, p):
    """Pure-JAX fp32 reference with identical math (correctness check)."""
    def gat(h_in, w, asrc, adst, b):
        h = h_in @ w
        e = (h @ adst.T) + (h @ asrc.T).T
        e = jnp.where(e > 0, e, NEG_SLOPE * e)
        e = jnp.where(adj > 0, e, -1e30)
        e = e - jnp.max(e, axis=-1, keepdims=True)
        a = jnp.exp(e)
        a = a / jnp.sum(a, axis=-1, keepdims=True)
        return a @ h + b
    h = jax.nn.relu(gat(x, p["w1"], p["as1"], p["ad1"], p["b1"]))
    h = gat(h, p["w2"], p["as2"], p["ad2"], p["b2"])
    h = jax.nn.relu(h @ p["wl1"] + p["bl1"])
    return h @ p["wl2"] + p["bl2"]


if __name__ == "__main__":
    key = jax.random.PRNGKey(0)
    k_x, k_e, k_p = jax.random.split(key, 3)

    G = 2           # graphs per batch (grid axis, "parallel")
    N = 32          # nodes per graph
    INPUT_DIM = 8   # node feature dimension
    E = 96          # directed edges per graph

    xs = jax.random.normal(k_x, (G, N, INPUT_DIM), jnp.float32)
    edge_keys = jax.random.split(k_e, G)
    adjs = jnp.stack([
        build_adjacency(jax.random.randint(edge_keys[g], (2, E), 0, N, jnp.int32), N)
        for g in range(G)])
    mask_bias = build_mask_bias(adjs)                       # [G,N,N] bf16
    params = init_params(k_p, INPUT_DIM)
    packed, offs = pack_params(params, INPUT_DIM)

    ref = jnp.stack([reference_forward(xs[g], adjs[g], params) for g in range(G)])

    # f32 aggregation path: tight check (exact reciprocal, exact exp).
    fwd_f32 = make_forward(INPUT_DIM, offs, agg_dtype=jnp.float32)
    out = jax.block_until_ready(fwd_f32(xs, mask_bias, packed))
    assert out.shape == (G, N, 1)
    assert jnp.allclose(out, ref, rtol=2e-3, atol=2e-3), "f32 kernel mismatch vs reference"

    # bf16 aggregation path (bf16 exp + bf16 p@h; the throughput knob): looser check.
    fwd_bf16 = make_forward(INPUT_DIM, offs, agg_dtype=jnp.bfloat16)
    out_bf = jax.block_until_ready(fwd_bf16(xs, mask_bias, packed))
    assert jnp.allclose(out_bf, ref, rtol=1e-1, atol=1e-1), "bf16 kernel mismatch vs reference"

    print("KERNEL_OK")
</pallas_src>

<mosaic_0001>
module attributes {stable_mosaic.version = 11 : i64} {
  func.func @gat_regression_kernel(%arg0: i32, %arg1: memref<1x32x8xf32, #tpu.memory_space<vmem>>, %arg2: memref<1x32x32xbf16, #tpu.memory_space<vmem>>, %arg3: memref<64x128xf32, #tpu.memory_space<vmem>>, %arg4: memref<1x32x128xf32, #tpu.memory_space<vmem>>) attributes {dimension_semantics = [#tpu.dimension_semantics<parallel>], iteration_bounds = array<i64: 2>, scalar_prefetch = 0 : i64, scratch_operands = 0 : i64, tpu.core_type = #tpu.core_type<tc>, window_params = [{transform_indices = @transform_0, window_bounds = array<i64: 1, 32, 8>}, {transform_indices = @transform_1, window_bounds = array<i64: 1, 32, 32>}, {pipeline_mode = #tpu.pipeline_mode<synchronous>, transform_indices = @transform_2, window_bounds = array<i64: 64, 128>}, {transform_indices = @transform_3, window_bounds = array<i64: 1, 32, 128>}]} {
    %c0 = arith.constant 0 : index
    %c0_0 = arith.constant 0 : index
    %c0_1 = arith.constant 0 : index
    %0 = vector.load %arg1[%c0, %c0_0, %c0_1] : memref<1x32x8xf32, #tpu.memory_space<vmem>>, vector<1x32x8xf32>
    %1 = vector.shape_cast %0 : vector<1x32x8xf32> to vector<32x8xf32>
    %c8 = arith.constant 8 : index
    %c0_2 = arith.constant 0 : index
    %2 = vector.load %arg3[%c8, %c0_2] : memref<64x128xf32, #tpu.memory_space<vmem>>, vector<8x16xf32>
    %3 = vector.extract_strided_slice %2 {offsets = [0, 0], sizes = [1, 16], strides = [1, 1]} : vector<8x16xf32> to vector<1x16xf32>
    %4 = vector.extract_strided_slice %2 {offsets = [1, 0], sizes = [1, 16], strides = [1, 1]} : vector<8x16xf32> to vector<1x16xf32>
    %5 = vector.extract_strided_slice %2 {offsets = [2, 0], sizes = [1, 16], strides = [1, 1]} : vector<8x16xf32> to vector<1x16xf32>
    %c32 = arith.constant 32 : index
    %c0_3 = arith.constant 0 : index
    %6 = vector.load %arg3[%c32, %c0_3] : memref<64x128xf32, #tpu.memory_space<vmem>>, vector<8x10xf32>
    %7 = vector.extract_strided_slice %6 {offsets = [0, 0], sizes = [1, 10], strides = [1, 1]} : vector<8x10xf32> to vector<1x10xf32>
    %8 = vector.extract_strided_slice %6 {offsets = [1, 0], sizes = [1, 10], strides = [1, 1]} : vector<8x10xf32> to vector<1x10xf32>
    %9 = vector.extract_strided_slice %6 {offsets = [2, 0], sizes = [1, 10], strides = [1, 1]} : vector<8x10xf32> to vector<1x10xf32>
    %c56 = arith.constant 56 : index
    %c0_4 = arith.constant 0 : index
    %10 = vector.load %arg3[%c56, %c0_4] : memref<64x128xf32, #tpu.memory_space<vmem>>, vector<8x10xf32>
    %11 = vector.extract_strided_slice %10 {offsets = [0, 0], sizes = [1, 10], strides = [1, 1]} : vector<8x10xf32> to vector<1x10xf32>
    %12 = vector.extract_strided_slice %10 {offsets = [1, 0], sizes = [1, 10], strides = [1, 1]} : vector<8x10xf32> to vector<1x10xf32>
    %13 = vector.extract_strided_slice %10 {offsets = [2, 0], sizes = [1, 1], strides = [1, 1]} : vector<8x10xf32> to vector<1x1xf32>
    %c0_5 = arith.constant 0 : index
    %c0_6 = arith.constant 0 : index
    %14 = vector.load %arg3[%c0_5, %c0_6] : memref<64x128xf32, #tpu.memory_space<vmem>>, vector<8x16xf32>
    %cst = arith.constant dense<0.000000e+00> : vector<32x16xf32>
    %15 = tpu.matmul %1, %14, %cst {dimension_numbers = #tpu.dot_dimension_numbers<[1], [0], [0], [1], [0, 0, 1, 1], [], []>} : vector<32x8xf32>, vector<8x16xf32>, vector<32x16xf32> -> vector<32x16xf32>
    %16 = vector.broadcast %4 : vector<1x16xf32> to vector<32x16xf32>
    %17 = arith.mulf %15, %16 : vector<32x16xf32>
    %cst_7 = arith.constant dense<0.000000e+00> : vector<32xf32>
    %18 = vector.multi_reduction <add>, %17, %cst_7 [1] : vector<32x16xf32> to vector<32xf32>
    %19 = vector.shape_cast %18 : vector<32xf32> to vector<32x1xf32>
    %cst_8 = arith.constant dense<0.000000e+00> : vector<1x32xf32>
    %20 = tpu.matmul %3, %15, %cst_8 {dimension_numbers = #tpu.dot_dimension_numbers<[1], [1], [0], [0], [0, 0, 1, 0], [], []>} : vector<1x16xf32>, vector<32x16xf32>, vector<1x32xf32> -> vector<1x32xf32>
    %21 = vector.broadcast %19 : vector<32x1xf32> to vector<32x32xf32>
    %22 = vector.broadcast %20 : vector<1x32xf32> to vector<32x32xf32>
    %23 = arith.addf %21, %22 : vector<32x32xf32>
    %cst_9 = arith.constant 2.000000e-01 : f32
    %24 = vector.broadcast %cst_9 : f32 to vector<32x32xf32>
    %25 = arith.mulf %24, %23 : vector<32x32xf32>
    %26 = arith.maximumf %23, %25 : vector<32x32xf32>
    %c0_10 = arith.constant 0 : index
    %c0_11 = arith.constant 0 : index
    %c0_12 = arith.constant 0 : index
    %27 = vector.load %arg2[%c0_10, %c0_11, %c0_12] : memref<1x32x32xbf16, #tpu.memory_space<vmem>>, vector<1x32x32xbf16>
    %28 = vector.shape_cast %27 : vector<1x32x32xbf16> to vector<32x32xbf16>
    %29 = arith.extf %28 : vector<32x32xbf16> to vector<32x32xf32>
    %30 = arith.addf %26, %29 : vector<32x32xf32>
    %cst_13 = arith.constant dense<0xFF800000> : vector<32xf32>
    %31 = vector.multi_reduction <maximumf>, %30, %cst_13 [1] : vector<32x32xf32> to vector<32xf32>
    %32 = vector.shape_cast %31 : vector<32xf32> to vector<32x1xf32>
    %33 = vector.broadcast %32 : vector<32x1xf32> to vector<32x32xf32>
    %34 = arith.subf %30, %33 : vector<32x32xf32>
    %35 = math.exp %34 : vector<32x32xf32>
    %cst_14 = arith.constant dense<0.000000e+00> : vector<32xf32>
    %36 = vector.multi_reduction <add>, %35, %cst_14 [1] : vector<32x32xf32> to vector<32xf32>
    %37 = vector.shape_cast %36 : vector<32xf32> to vector<32x1xf32>
    %cst_15 = arith.constant dense<0.000000e+00> : vector<32x16xf32>
    %38 = tpu.matmul %35, %15, %cst_15 {dimension_numbers = #tpu.dot_dimension_numbers<[1], [0], [0], [1], [0, 0, 1, 1], [], []>} : vector<32x32xf32>, vector<32x16xf32>, vector<32x16xf32> -> vector<32x16xf32>
    %cst_16 = arith.constant 1.000000e+00 : f32
    %39 = vector.broadcast %cst_16 : f32 to vector<32x1xf32>
    %40 = arith.divf %39, %37 : vector<32x1xf32>
    %41 = vector.broadcast %40 : vector<32x1xf32> to vector<32x16xf32>
    %42 = arith.mulf %38, %41 : vector<32x16xf32>
    %43 = vector.broadcast %5 : vector<1x16xf32> to vector<32x16xf32>
    %44 = arith.addf %42, %43 : vector<32x16xf32>
    %cst_17 = arith.constant 0.000000e+00 : f32
    %45 = vector.broadcast %cst_17 : f32 to vector<32x16xf32>
    %46 = arith.maximumf %44, %45 : vector<32x16xf32>
    %c16 = arith.constant 16 : index
    %c0_18 = arith.constant 0 : index
    %47 = vector.load %arg3[%c16, %c0_18] : memref<64x128xf32, #tpu.memory_space<vmem>>, vector<16x10xf32>
    %cst_19 = arith.constant dense<0.000000e+00> : vector<32x10xf32>
    %48 = tpu.matmul %46, %47, %cst_19 {dimension_numbers = #tpu.dot_dimension_numbers<[1], [0], [0], [1], [0, 0, 1, 1], [], []>} : vector<32x16xf32>, vector<16x10xf32>, vector<32x10xf32> -> vector<32x10xf32>
    %49 = vector.broadcast %8 : vector<1x10xf32> to vector<32x10xf32>
    %50 = arith.mulf %48, %49 : vector<32x10xf32>
    %cst_20 = arith.constant dense<0.000000e+00> : vector<32xf32>
    %51 = vector.multi_reduction <add>, %50, %cst_20 [1] : vector<32x10xf32> to vector<32xf32>
    %52 = vector.shape_cast %51 : vector<32xf32> to vector<32x1xf32>
    %cst_21 = arith.constant dense<0.000000e+00> : vector<1x32xf32>
    %53 = tpu.matmul %7, %48, %cst_21 {dimension_numbers = #tpu.dot_dimension_numbers<[1], [1], [0], [0], [0, 0, 1, 0], [], []>} : vector<1x10xf32>, vector<32x10xf32>, vector<1x32xf32> -> vector<1x32xf32>
    %54 = vector.broadcast %52 : vector<32x1xf32> to vector<32x32xf32>
    %55 = vector.broadcast %53 : vector<1x32xf32> to vector<32x32xf32>
    %56 = arith.addf %54, %55 : vector<32x32xf32>
    %cst_22 = arith.constant 2.000000e-01 : f32
    %57 = vector.broadcast %cst_22 : f32 to vector<32x32xf32>
    %58 = arith.mulf %57, %56 : vector<32x32xf32>
    %59 = arith.maximumf %56, %58 : vector<32x32xf32>
    %c0_23 = arith.constant 0 : index
    %c0_24 = arith.constant 0 : index
    %c0_25 = arith.constant 0 : index
    %60 = vector.load %arg2[%c0_23, %c0_24, %c0_25] : memref<1x32x32xbf16, #tpu.memory_space<vmem>>, vector<1x32x32xbf16>
    %61 = vector.shape_cast %60 : vector<1x32x32xbf16> to vector<32x32xbf16>
    %62 = arith.extf %61 : vector<32x32xbf16> to vector<32x32xf32>
    %63 = arith.addf %59, %62 : vector<32x32xf32>
    %cst_26 = arith.constant dense<0xFF800000> : vector<32xf32>
    %64 = vector.multi_reduction <maximumf>, %63, %cst_26 [1] : vector<32x32xf32> to vector<32xf32>
    %65 = vector.shape_cast %64 : vector<32xf32> to vector<32x1xf32>
    %66 = vector.broadcast %65 : vector<32x1xf32> to vector<32x32xf32>
    %67 = arith.subf %63, %66 : vector<32x32xf32>
    %68 = math.exp %67 : vector<32x32xf32>
    %cst_27 = arith.constant dense<0.000000e+00> : vector<32xf32>
    %69 = vector.multi_reduction <add>, %68, %cst_27 [1] : vector<32x32xf32> to vector<32xf32>
    %70 = vector.shape_cast %69 : vector<32xf32> to vector<32x1xf32>
    %cst_28 = arith.constant dense<0.000000e+00> : vector<32x10xf32>
    %71 = tpu.matmul %68, %48, %cst_28 {dimension_numbers = #tpu.dot_dimension_numbers<[1], [0], [0], [1], [0, 0, 1, 1], [], []>} : vector<32x32xf32>, vector<32x10xf32>, vector<32x10xf32> -> vector<32x10xf32>
    %cst_29 = arith.constant 1.000000e+00 : f32
    %72 = vector.broadcast %cst_29 : f32 to vector<32x1xf32>
    %73 = arith.divf %72, %70 : vector<32x1xf32>
    %74 = vector.broadcast %73 : vector<32x1xf32> to vector<32x10xf32>
    %75 = arith.mulf %71, %74 : vector<32x10xf32>
    %76 = vector.broadcast %9 : vector<1x10xf32> to vector<32x10xf32>
    %77 = arith.addf %75, %76 : vector<32x10xf32>
    %c40 = arith.constant 40 : index
    %c0_30 = arith.constant 0 : index
    %78 = vector.load %arg3[%c40, %c0_30] : memref<64x128xf32, #tpu.memory_space<vmem>>, vector<10x10xf32>
    %cst_31 = arith.constant dense<0.000000e+00> : vector<32x10xf32>
    %79 = tpu.matmul %77, %78, %cst_31 {dimension_numbers = #tpu.dot_dimension_numbers<[1], [0], [0], [1], [0, 0, 1, 1], [], []>} : vector<32x10xf32>, vector<10x10xf32>, vector<32x10xf32> -> vector<32x10xf32>
    %80 = vector.broadcast %11 : vector<1x10xf32> to vector<32x10xf32>
    %81 = arith.addf %79, %80 : vector<32x10xf32>
    %cst_32 = arith.constant 0.000000e+00 : f32
    %82 = vector.broadcast %cst_32 : f32 to vector<32x10xf32>
    %83 = arith.maximumf %81, %82 : vector<32x10xf32>
    %84 = vector.broadcast %12 : vector<1x10xf32> to vector<32x10xf32>
    %85 = arith.mulf %83, %84 : vector<32x10xf32>
    %cst_33 = arith.constant dense<0.000000e+00> : vector<32xf32>
    %86 = vector.multi_reduction <add>, %85, %cst_33 [1] : vector<32x10xf32> to vector<32xf32>
    %87 = vector.shape_cast %86 : vector<32xf32> to vector<32x1xf32>
    %88 = vector.broadcast %13 : vector<1x1xf32> to vector<32x1xf32>
    %89 = arith.addf %87, %88 : vector<32x1xf32>
    %90 = vector.shape_cast %89 : vector<32x1xf32> to vector<32x1xf32>
    %91 = vector.broadcast %90 : vector<32x1xf32> to vector<32x128xf32>
    %c0_34 = arith.constant 0 : index
    %c0_35 = arith.constant 0 : index
    %c0_36 = arith.constant 0 : index
    %92 = vector.load %arg4[%c0_34, %c0_35, %c0_36] : memref<1x32x128xf32, #tpu.memory_space<vmem>>, vector<1x32x128xf32>
    %93 = vector.shape_cast %92 : vector<1x32x128xf32> to vector<32x128xf32>
    %94 = vector.shape_cast %91 : vector<32x128xf32> to vector<1x32x128xf32>
    tpu.vector_store %arg4[%c0_34, %c0_35, %c0_36], %94 {strides = array<i32>} : memref<1x32x128xf32, #tpu.memory_space<vmem>>, vector<1x32x128xf32>,
    return
  }
  func.func @transform_0(%arg0: i32) -> (i32, i32, i32) {
    %c0_i32 = arith.constant 0 : i32
    %c0_i32_0 = arith.constant 0 : i32
    %c0_i32_1 = arith.constant 0 : i32
    return %arg0, %c0_i32, %c0_i32_0 : i32, i32, i32
  }
  func.func @transform_1(%arg0: i32) -> (i32, i32, i32) {
    %c0_i32 = arith.constant 0 : i32
    %c0_i32_0 = arith.constant 0 : i32
    %c0_i32_1 = arith.constant 0 : i32
    return %arg0, %c0_i32, %c0_i32_0 : i32, i32, i32
  }
  func.func @transform_2(%arg0: i32) -> (i32, i32) {
    %c0_i32 = arith.constant 0 : i32
    %c0_i32_0 = arith.constant 0 : i32
    %c0_i32_1 = arith.constant 0 : i32
    return %c0_i32, %c0_i32_0 : i32, i32
  }
  func.func @transform_3(%arg0: i32) -> (i32, i32, i32) {
    %c0_i32 = arith.constant 0 : i32
    %c0_i32_0 = arith.constant 0 : i32
    %c0_i32_1 = arith.constant 0 : i32
    return %arg0, %c0_i32, %c0_i32_0 : i32, i32, i32
  }
}

</mosaic_0001>

<llo_original>
// kernel: forward.1
$region0: #{forward.1}
  #allocation0 [shape = 'u32[]', space=smem, size = 0x4, offset = 0x4, fixed_abs, tag = 'smem constant byte address 0x4 - core index']
  #allocation1 [shape = 'u32[72,128]{1,0:T(1,128)}', space=vmem, size = 0x9000, scoped, tag = 'internal scratch']
  %s0 = inlined_call_operand.vmem [shape: f32[2,32,8], index: 0, kind: input, shape index: {}]
  %s1 = inlined_call_operand.hbm [shape: bf16[2,32,32], index: 1, kind: input, shape index: {}]
  %s2 = inlined_call_operand.vmem [shape: f32[64,128], index: 2, kind: input, shape index: {}]
  %s3 = inlined_call_operand.vmem [shape: f32[2,32,128], index: 3, kind: output, shape index: {}]
  %s4 = sld [smem:[#allocation0]]
  $region49: #{forward.1} parent=0
    _
  %s6 = ssub.s32 1, %s4
  %s7 = scalar_select 0, %s6, %s4
  $region1: #{forward.1} parent=0
    #allocation2 [shape = 'u8[16384]{0}', space=vmem, size = 0x4000, scoped, tag = 'input window, operand 1']
    #allocation3 [shape = 's32[2]{0}', space=sflag, size = 0x8, scoped, tag = 'scoped memory for forward.1']
    %8 = vsyncpa [#allocation3], 0
    %s9 = scalar_lea.sflag [#allocation3], 1
    %10 = vsyncpa %s9, 0
    loop: start=0, step=1, limit=4
    $region2: #{forward.1} parent=1 // loop_pre_header
      _
    $region3: #{forward.1} parent=1 // loop_header
      %s12 = sphi 0, %s16
      %p13 = scmp.ge.s32.totalorder %s12, 4
      %s22 = sphi 0, %s24
      %s25 = sphi 0, %s22
      %s26 = sphi 0, %s25
      %s42 = sphi 0, %s26
      %s48 = sphi 0, %s50
      %s51 = sphi 0, %s48
      %s52 = sphi 0, %s51
      %s68 = sphi 0, %s52
      %s72 = sphi 0, %s72
      %s74 = sphi 0, %s72
      %s75 = sphi 0, %s74
      %s89 = sphi 0, %s75
      %s95 = sphi 0, %s97
      %s98 = sphi 0, %s95
      %s99 = sphi 0, %s98
      %s115 = sphi 0, %s99
    $region4: #{forward.1} parent=1 // loop_header_branch
      %15 = sbr.rel (%p13) target = $region8
    $region5: #{forward.1} parent=1 // loop_body
      %s17 = ssub.s32 %s12, 1
      %s18 = ssub.s32 %s12, 2
      %s19 = sadd.s32 %s12, 1
      %s20 = ssub.s32 %s12, %s19
      %p21 = scmp.eq.s32.totalorder %s20, 0
      %s23 = sadd.s32 %s22, 1
      %s24 = scalar_select %p21, %s22, %s23
      %p27 = pneg %p21
      %p28 = scmp.eq.s32.totalorder %s12, 1
      %p29 = por %p27, %p28
      %p30 = scmp.ne.s32.totalorder %s22, %s25
      %p31 = scmp.eq.s32.totalorder %s12, 0
      %p32 = por %p30, %p31
      %p33 = scmp.ne.s32.totalorder %s22, %s25
      %p34 = scmp.eq.s32.totalorder %s17, 1
      %p35 = por %p33, %p34
      %p36 = scmp.ne.s32.totalorder %s25, %s26
      %p37 = scmp.eq.s32.totalorder %s17, 0
      %p38 = por %p36, %p37
      %p39 = scmp.ne.s32.totalorder %s25, %s26
      %p40 = scmp.eq.s32.totalorder %s18, 1
      %p41 = por %p39, %p40
      %p43 = scmp.ne.s32.totalorder %s26, %s42
      %p44 = scmp.eq.s32.totalorder %s18, 0
      %p45 = por %p43, %p44
      %s46 = ssub.s32 %s12, %s19
      %p47 = scmp.eq.s32.totalorder %s46, 0
      %s49 = sadd.s32 %s48, 1
      %s50 = scalar_select %p47, %s48, %s49
      %p53 = pneg %p47
      %p54 = scmp.eq.s32.totalorder %s12, 1
      %p55 = por %p53, %p54
      %p56 = scmp.ne.s32.totalorder %s48, %s51
      %p57 = scmp.eq.s32.totalorder %s12, 0
      %p58 = por %p56, %p57
      %p59 = scmp.ne.s32.totalorder %s48, %s51
      %p60 = scmp.eq.s32.totalorder %s17, 1
      %p61 = por %p59, %p60
      %p62 = scmp.ne.s32.totalorder %s51, %s52
      %p63 = scmp.eq.s32.totalorder %s17, 0
      %p64 = por %p62, %p63
      %p65 = scmp.ne.s32.totalorder %s51, %s52
      %p66 = scmp.eq.s32.totalorder %s18, 1
      %p67 = por %p65, %p66
      %p69 = scmp.ne.s32.totalorder %s52, %s68
      %p70 = scmp.eq.s32.totalorder %s18, 0
      %p71 = por %p69, %p70
      %s73 = sadd.s32 %s72, 1
      %p76 = scmp.eq.s32.totalorder %s12, 1
      %p77 = scmp.ne.s32.totalorder %s72, %s74
      %p78 = scmp.eq.s32.totalorder %s12, 0
      %p79 = por %p77, %p78
      %p80 = scmp.ne.s32.totalorder %s72, %s74
      %p81 = scmp.eq.s32.totalorder %s17, 1
      %p82 = por %p80, %p81
      %p83 = scmp.ne.s32.totalorder %s74, %s75
      %p84 = scmp.eq.s32.totalorder %s17, 0
      %p85 = por %p83, %p84
      %p86 = scmp.ne.s32.totalorder %s74, %s75
      %p87 = scmp.eq.s32.totalorder %s18, 1
      %p88 = por %p86, %p87
      %p90 = scmp.ne.s32.totalorder %s75, %s89
      %p91 = scmp.eq.s32.totalorder %s18, 0
      %p92 = por %p90, %p91
      %s93 = ssub.s32 %s12, %s19
      %p94 = scmp.eq.s32.totalorder %s93, 0
      %s96 = sadd.s32 %s95, 1
      %s97 = scalar_select %p94, %s95, %s96
      %p100 = pneg %p94
      %p101 = scmp.eq.s32.totalorder %s12, 1
      %p102 = por %p100, %p101
      %p103 = scmp.ne.s32.totalorder %s95, %s98
      %p104 = scmp.eq.s32.totalorder %s12, 0
      %p105 = por %p103, %p104
      %p106 = scmp.ne.s32.totalorder %s95, %s98
      %p107 = scmp.eq.s32.totalorder %s17, 1
      %p108 = por %p106, %p107
      %p109 = scmp.ne.s32.totalorder %s98, %s99
      %p110 = scmp.eq.s32.totalorder %s17, 0
      %p111 = por %p109, %p110
      %p112 = scmp.ne.s32.totalorder %s98, %s99
      %p113 = scmp.eq.s32.totalorder %s18, 1
      %p114 = por %p112, %p113
      %p116 = scmp.ne.s32.totalorder %s99, %s115
      %p117 = scmp.eq.s32.totalorder %s18, 0
      %p118 = por %p116, %p117
      %p119 = scmp.le.s32.totalorder 1, %s12
      %p120 = scmp.lt.s32.totalorder %s12, 3
      %p121 = pnand %p119, %p120
      %p122 = pneg %p121
      // Predicated region
      $region9: #{forward.1} parent=5 // pred_check
        _
      $region10: #{forward.1} parent=5 // pred_check_branch
        %124 = sbr.rel (%p121) target = $region12
      $region11: #{forward.1} parent=5 // pred_region
        %s125 = ssub.s32 %s12, 1
        // Predicated region
        $region13: #{forward.1} parent=11 // pred_check
          %p126 = pneg %p85
        $region14: #{forward.1} parent=11 // pred_check_branch
          %128 = sbr.rel (%p126) target = $region16
        $region15: #{forward.1} parent=11 // pred_region
          _
        $region16: #{forward.1} parent=11 // pred_fallthru
          _
      $region12: #{forward.1} parent=5 // pred_fallthru
        _
      %p129 = scmp.lt.s32.totalorder %s12, 2
      // Predicated region
      $region17: #{forward.1} parent=5 // pred_check
        %p130 = pneg %p129
      $region18: #{forward.1} parent=5 // pred_check_branch
        %132 = sbr.rel (%p130) target = $region20
      $region19: #{forward.1} parent=5 // pred_region
        // Predicated region
        $region21: #{forward.1} parent=19 // pred_check
          %p133 = pneg %p32
        $region22: #{forward.1} parent=19 // pred_check_branch
          %135 = sbr.rel (%p133) target = $region24
        $region23: #{forward.1} parent=19 // pred_region
          %p136 = scmp.lt.s32.totalorder %s12, 1
          %s137 = scalar_select %p136, %s12, 1
          %s138 = smul.addr %s137, 4
          %s139 = smul.addr %s138, 8
          %s140 = scalar_lea.vmem %s0, %s139
        $region24: #{forward.1} parent=19 // pred_fallthru
          _
        // Predicated region
        $region25: #{forward.1} parent=19 // pred_check
          %p141 = pneg %p58
        $region26: #{forward.1} parent=19 // pred_check_branch
          %143 = sbr.rel (%p141) target = $region28
        $region27: #{forward.1} parent=19 // pred_region
          %s144 = sand.u32 %s48, 1
          %s145 = scalar_lea.sflag [#allocation3], %s144
          %s146 = sand.u32 %s48, 1
          %s147 = smul.addr %s146, 16
          %s148 = scalar_lea.vmem [#allocation2], %s147
          %150 = vsyncadd %s145, 0
          %s151 = smul.addr %s12, 4
          %s152 = smul.addr %s151, 4
          %s153 = scalar_lea.hbm %s1, %s152
          %s154 = sshll.u32 %s153, 4
          %s155 = int_to_ptr.hbm [resolvable:$true] %s154
          %s156 = sshll.u32 %s148, 4
          %s157 = int_to_ptr.vmem [resolvable:$true] %s156
          %162 = dma.hbm_to_vmem [thread:$0]  %s155, 256, %s157, %s145, 64, 64, 4
        $region28: #{forward.1} parent=19 // pred_fallthru
          _
      $region20: #{forward.1} parent=5 // pred_fallthru
        _
      %p163 = scmp.le.s32.totalorder 1, %s12
      %p164 = scmp.lt.s32.totalorder %s12, 3
      %p165 = pnand %p163, %p164
      %p166 = pneg %p165
      // Predicated region
      $region29: #{forward.1} parent=5 // pred_check
        _
      $region30: #{forward.1} parent=5 // pred_check_branch
        %168 = sbr.rel (%p165) target = $region32
      $region31: #{forward.1} parent=5 // pred_region
        %s169 = ssub.s32 %s12, 1
        %s170 = sand.u32 %s51, 1
        %s171 = scalar_lea.sflag [#allocation3], %s170
        %s172 = sand.u32 %s51, 1
        %s173 = smul.addr %s172, 16
        %s174 = scalar_lea.vmem [#allocation2], %s173
        // Predicated region
        $region33: #{forward.1} parent=31 // pred_check
          %p175 = pneg %p64
        $region34: #{forward.1} parent=31 // pred_check_branch
          %177 = sbr.rel (%p175) target = $region36
        $region35: #{forward.1} parent=31 // pred_region
          %179 = dma.done %s171, 256
        $region36: #{forward.1} parent=31 // pred_fallthru
          _
        %p180 = scmp.lt.s32.totalorder %s17, 1
        %s181 = scalar_select %p180, %s17, 1
        %s182 = smul.addr %s181, 4
        %s183 = smul.addr %s182, 8
        %s184 = scalar_lea.vmem %s0, %s183
        %p185 = pneg %p38
        %p186 = pneg %p35
        %s187 = sand.u32 %s51, 1
        %s188 = scalar_lea.sflag [#allocation3], %s187
        %s189 = sand.u32 %s51, 1
        %s190 = smul.addr %s189, 16
        %s191 = scalar_lea.vmem [#allocation2], %s190
        %p192 = pneg %p64
        %p193 = pneg %p61
        %p194 = pneg %p85
        %p195 = pneg %p82
        %p196 = pneg %p111
        %p197 = pneg %p108
        %p198 = scmp.lt.s32.totalorder %s17, 1
        %s199 = scalar_select %p198, %s17, 1
        %s200 = smul.addr %s199, 4
        %s201 = smul.addr %s200, 8
        %s202 = scalar_lea.vmem %s3, %s201
        %p203 = scmp.lt.s32.totalorder %s17, 1
        %s204 = scalar_select %p203, %s17, 1
        %s205 = smul.addr %s204, 4
        %s206 = smul.addr %s205, 8
        %s207 = scalar_lea.vmem %s0, %s206
        %p208 = scmp.lt.s32.totalorder %s17, 1
        %s209 = scalar_select %p208, %s17, 1
        %s210 = smul.addr %s209, 4
        %s211 = smul.addr %s210, 8
        %s212 = scalar_lea.vmem %s3, %s211
        %v213 = vld [vmem:[%s207] sm:$0xff]
        %v214 = vld [vmem:[%s207 + $0x8] sm:$0xff]
        %v215 = vld [vmem:[%s207 + $0x10] sm:$0xff]
        %v216 = vld [vmem:[%s207 + $0x18] sm:$0xff]
        %v217 = vld [vmem:[%s2 + $0x8] sm:$0xff]
        %v218 = vld [vmem:[%s2 + $0x20] sm:$0xff]
        %v219 = vld [vmem:[%s2 + $0x38] sm:$0xff]
        %v220 = vld [vmem:[%s2] sm:$0xff]
        %vm221 = vcmask 64512
        %v223 = vsel %vm221, %v213, 0
        %v226 = vsel %vm221, %v214, 0
        %v229 = vsel %vm221, %v215, 0
        %v232 = vsel %vm221, %v216, 0
        %234 = vmatpush.msra.mxu0 0.0
        %235 = vmatpush.msra.mxu0 0.0
        %236 = vmatpush.msra.mxu0 0.0
        %237 = vmatpush.msra.mxu0 0.0
        %238 = vmatpush.msra.mxu0 0.0
        %239 = vmatpush.msra.mxu0 0.0
        %240 = vmatpush.msra.mxu0 0.0
        %241 = vmatpush.msra.mxu0 0.0
        %242 = vmatpush.msra.mxu0 0.0
        %243 = vmatpush.msra.mxu0 0.0
        %244 = vmatpush.msra.mxu0 0.0
        %245 = vmatpush.msra.mxu0 0.0
        %246 = vmatpush.msra.mxu0 0.0
        %247 = vmatpush.msra.mxu0 0.0
        %248 = vmatpush.msra.mxu0 0.0
        %249 = vmatpush.msra.mxu0 %v220
        %250 = vmatmul.f32.gmra.mxu0 %v223
        %v251 = vpop.f32.mrf.mxu0
        %v252 = vadd.f32 0.0, %v251
        %253 = vmatmul.f32.gmra.mxu0 %v226
        %v254 = vpop.f32.mrf.mxu0
        %v255 = vadd.f32 0.0, %v254
        %256 = vmatmul.f32.gmra.mxu0 %v229
        %v257 = vpop.f32.mrf.mxu0
        %v258 = vadd.f32 0.0, %v257
        %259 = vmatmul.f32.gmra.mxu0 %v232
        %v260 = vpop.f32.mrf.mxu0
        %v261 = vadd.f32 0.0, %v260
        %262 = vdwg.mxu0
        %v263 = vperm.slane %v217, 1
        %v264 = vmul.f32 %v252, %v263
        %v265 = vmul.f32 %v255, %v263
        %v266 = vmul.f32 %v258, %v263
        %v267 = vmul.f32 %v261, %v263
        %vm268 = vcmask 130048
        %v269 = vsel %vm268, %v264, 0.0
        %270 = vadd.xlane.f32.xlu0 %v269
        %v271 = vpop.xlane.xlu0 %270
        %v272 = vsel %vm268, %v265, 0.0
        %273 = vadd.xlane.f32.xlu0 %v272
        %v274 = vpop.xlane.xlu0 %273
        %v275 = vsel %vm268, %v266, 0.0
        %276 = vadd.xlane.f32.xlu0 %v275
        %v277 = vpop.xlane.xlu0 %276
        %v278 = vsel %vm268, %v267, 0.0
        %279 = vadd.xlane.f32.xlu0 %v278
        %v280 = vpop.xlane.xlu0 %279
        %v282 = vsel %vm268, %v217, 0
        %v285 = vsel %vm268, %v252, 0
        %v288 = vsel %vm268, %v255, 0
        %v291 = vsel %vm268, %v258, 0
        %v294 = vsel %vm268, %v261, 0
        %296 = vmatpush.xpose.msra.mxu0 0.0
        %297 = vmatpush.xpose.msra.mxu0 0.0
        %298 = vmatpush.xpose.msra.mxu0 0.0
        %299 = vmatpush.xpose.msra.mxu0 0.0
        %300 = vmatpush.xpose.msra.mxu0 0.0
        %301 = vmatpush.xpose.msra.mxu0 0.0
        %302 = vmatpush.xpose.msra.mxu0 0.0
        %303 = vmatpush.xpose.msra.mxu0 0.0
        %304 = vmatpush.xpose.msra.mxu0 0.0
        %305 = vmatpush.xpose.msra.mxu0 0.0
        %306 = vmatpush.xpose.msra.mxu0 0.0
        %307 = vmatpush.xpose.msra.mxu0 0.0
        %308 = vmatpush.xpose.msra.mxu0 %v294
        %309 = vmatpush.xpose.msra.mxu0 %v291
        %310 = vmatpush.xpose.msra.mxu0 %v288
        %311 = vmatpush.xpose.msra.mxu0 %v285
        %312 = vmatmul.f32.gmra.mxu0 %v282
        %v313 = vpop.f32.mrf.mxu0
        %v314 = vadd.f32 0.0, %v313
        %315 = vdwg.mxu0
        %v316 = vperm.slane %v314, 0
        %v317 = vadd.f32 %v271, %v316
        %v318 = vadd.f32 %v274, %v316
        %v319 = vadd.f32 %v277, %v316
        %v320 = vadd.f32 %v280, %v316
        %v321 = vmul.f32 %v317, 0.2
        %v322 = vmul.f32 %v318, 0.2
        %v323 = vmul.f32 %v319, 0.2
        %v324 = vmul.f32 %v320, 0.2
        %v325 = vmax.f32 %v317, %v321
        %v326 = vmax.f32 %v318, %v322
        %v327 = vmax.f32 %v319, %v323
        %v328 = vmax.f32 %v320, %v324
        %v329 = vld [vmem:[%s174] sm:$0xf]
        %v330 = vld [vmem:[%s174 + $0x4] sm:$0xf]
        %v331 = vld [vmem:[%s174 + $0x8] sm:$0xf]
        %v332 = vld [vmem:[%s174 + $0xc] sm:$0xf]
        %v333 = vunpack.c.l.bf16 %v329
        %v334 = vunpack.c.l.bf16 %v330
        %v335 = vunpack.c.l.bf16 %v331
        %v336 = vunpack.c.l.bf16 %v332
        %v337 = vadd.f32 %v325, %v333
        %v338 = vadd.f32 %v326, %v334
        %v339 = vadd.f32 %v327, %v335
        %v340 = vadd.f32 %v328, %v336
        %vm341 = vcmask 261120
        %v342 = vsel %vm341, %v337, -inf
        %343 = vmax.xlane.f32.xlu0 %v342
        %v344 = vpop.xlane.xlu0 %343
        %v345 = vsel %vm341, %v338, -inf
        %346 = vmax.xlane.f32.xlu0 %v345
        %v347 = vpop.xlane.xlu0 %346
        %v348 = vsel %vm341, %v339, -inf
        %349 = vmax.xlane.f32.xlu0 %v348
        %v350 = vpop.xlane.xlu0 %349
        %v351 = vsel %vm341, %v340, -inf
        %352 = vmax.xlane.f32.xlu0 %v351
        %v353 = vpop.xlane.xlu0 %352
        %v354 = vsub.f32 %v337, %v344
        %v355 = vsub.f32 %v338, %v347
        %v356 = vsub.f32 %v339, %v350
        %v357 = vsub.f32 %v340, %v353
        %v358 = vmul.f32 %v354, 1.442695
        %v359 = vpow.pop %v358
        %v360 = vmul.f32 %v355, 1.442695
        %v361 = vpow.pop %v360
        %v362 = vmul.f32 %v356, 1.442695
        %v363 = vpow.pop %v362
        %v364 = vmul.f32 %v357, 1.442695
        %v365 = vpow.pop %v364
        %v366 = vsel %vm341, %v359, 0.0
        %367 = vadd.xlane.f32.xlu0 %v366
        %v368 = vpop.xlane.xlu0 %367
        %v369 = vsel %vm341, %v361, 0.0
        %370 = vadd.xlane.f32.xlu0 %v369
        %v371 = vpop.xlane.xlu0 %370
        %v372 = vsel %vm341, %v363, 0.0
        %373 = vadd.xlane.f32.xlu0 %v372
        %v374 = vpop.xlane.xlu0 %373
        %v375 = vsel %vm341, %v365, 0.0
        %376 = vadd.xlane.f32.xlu0 %v375
        %v377 = vpop.xlane.xlu0 %376
        %v379 = vsel %vm341, %v359, 0
        %v382 = vsel %vm341, %v361, 0
        %v385 = vsel %vm341, %v363, 0
        %v388 = vsel %vm341, %v365, 0
        %390 = vmatpush.msra.mxu0 0.0
        %391 = vmatpush.msra.mxu0 0.0
        %392 = vmatpush.msra.mxu0 0.0
        %393 = vmatpush.msra.mxu0 0.0
        %394 = vmatpush.msra.mxu0 0.0
        %395 = vmatpush.msra.mxu0 0.0
        %396 = vmatpush.msra.mxu0 0.0
        %397 = vmatpush.msra.mxu0 0.0
        %398 = vmatpush.msra.mxu0 0.0
        %399 = vmatpush.msra.mxu0 0.0
        %400 = vmatpush.msra.mxu0 0.0
        %401 = vmatpush.msra.mxu0 0.0
        %402 = vmatpush.msra.mxu0 %v261
        %403 = vmatpush.msra.mxu0 %v258
        %404 = vmatpush.msra.mxu0 %v255
        %405 = vmatpush.msra.mxu0 %v252
        %406 = vmatmul.f32.gmra.mxu0 %v379
        %v407 = vpop.f32.mrf.mxu0
        %v408 = vadd.f32 0.0, %v407
        %409 = vmatmul.f32.gmra.mxu0 %v382
        %v410 = vpop.f32.mrf.mxu0
        %v411 = vadd.f32 0.0, %v410
        %412 = vmatmul.f32.gmra.mxu0 %v385
        %v413 = vpop.f32.mrf.mxu0
        %v414 = vadd.f32 0.0, %v413
        %415 = vmatmul.f32.gmra.mxu0 %v388
        %v416 = vpop.f32.mrf.mxu0
        %v417 = vadd.f32 0.0, %v416
        %418 = vdwg.mxu0
        %v419 = vrcp.pop %v368
        %v420 = vmul.f32 %v368, %v419
        %v421 = vsub.f32 1.0, %v420
        %v422 = vmul.f32 %v419, %v421
        %v423 = vadd.f32 %v419, %v422
        %vm424 = vweird.f32 %v368
        %vm425 = vweird.f32 %v419
        %vm426 = vmor %vm424, %vm425
        %v427 = vsel %vm426, %v419, %v423
        %v428 = vand.u32 2147483647, %v368
        %vm429 = vcmp.eq.f32.partialorder %v428, 8.507059e+37
        %v430 = vand.u32 %v368, 2147483648
        %v431 = vor.u32 1.1754944e-38, %v430
        %v432 = vsel %vm429, %v431, %v427
        %v433 = vmul.f32 1.0, %v432
        %v434 = vrcp.pop %v371
        %v435 = vmul.f32 %v371, %v434
        %v436 = vsub.f32 1.0, %v435
        %v437 = vmul.f32 %v434, %v436
        %v438 = vadd.f32 %v434, %v437
        %vm439 = vweird.f32 %v371
        %vm440 = vweird.f32 %v434
        %vm441 = vmor %vm439, %vm440
        %v442 = vsel %vm441, %v434, %v438
        %v443 = vand.u32 2147483647, %v371
        %vm444 = vcmp.eq.f32.partialorder %v443, 8.507059e+37
        %v445 = vand.u32 %v371, 2147483648
        %v446 = vor.u32 1.1754944e-38, %v445
        %v447 = vsel %vm444, %v446, %v442
        %v448 = vmul.f32 1.0, %v447
        %v449 = vrcp.pop %v374
        %v450 = vmul.f32 %v374, %v449
        %v451 = vsub.f32 1.0, %v450
        %v452 = vmul.f32 %v449, %v451
        %v453 = vadd.f32 %v449, %v452
        %vm454 = vweird.f32 %v374
        %vm455 = vweird.f32 %v449
        %vm456 = vmor %vm454, %vm455
        %v457 = vsel %vm456, %v449, %v453
        %v458 = vand.u32 2147483647, %v374
        %vm459 = vcmp.eq.f32.partialorder %v458, 8.507059e+37
        %v460 = vand.u32 %v374, 2147483648
        %v461 = vor.u32 1.1754944e-38, %v460
        %v462 = vsel %vm459, %v461, %v457
        %v463 = vmul.f32 1.0, %v462
        %v464 = vrcp.pop %v377
        %v465 = vmul.f32 %v377, %v464
        %v466 = vsub.f32 1.0, %v465
        %v467 = vmul.f32 %v464, %v466
        %v468 = vadd.f32 %v464, %v467
        %vm469 = vweird.f32 %v377
        %vm470 = vweird.f32 %v464
        %vm471 = vmor %vm469, %vm470
        %v472 = vsel %vm471, %v464, %v468
        %v473 = vand.u32 2147483647, %v377
        %vm474 = vcmp.eq.f32.partialorder %v473, 8.507059e+37
        %v475 = vand.u32 %v377, 2147483648
        %v476 = vor.u32 1.1754944e-38, %v475
        %v477 = vsel %vm474, %v476, %v472
        %v478 = vmul.f32 1.0, %v477
        %v479 = vmul.f32 %v408, %v433
        %v480 = vmul.f32 %v411, %v448
        %v481 = vmul.f32 %v414, %v463
        %v482 = vmul.f32 %v417, %v478
        %v483 = vperm.slane %v217, 2
        %v484 = vadd.f32 %v479, %v483
        %v485 = vadd.f32 %v480, %v483
        %v486 = vadd.f32 %v481, %v483
        %v487 = vadd.f32 %v482, %v483
        %v488 = vmax.f32 %v484, 0.0
        %v489 = vmax.f32 %v485, 0.0
        %v490 = vmax.f32 %v486, 0.0
        %v491 = vmax.f32 %v487, 0.0
        %v492 = vld [vmem:[%s2 + $0x10] sm:$0xff]
        %v493 = vld [vmem:[%s2 + $0x18] sm:$0xff]
        %v495 = vsel %vm268, %v488, 0
        %v498 = vsel %vm268, %v489, 0
        %v501 = vsel %vm268, %v490, 0
        %v504 = vsel %vm268, %v491, 0
        %506 = vmatpush.msra.mxu0 0.0
        %507 = vmatpush.msra.mxu0 0.0
        %508 = vmatpush.msra.mxu0 0.0
        %509 = vmatpush.msra.mxu0 0.0
        %510 = vmatpush.msra.mxu0 0.0
        %511 = vmatpush.msra.mxu0 0.0
        %512 = vmatpush.msra.mxu0 0.0
        %513 = vmatpush.msra.mxu0 0.0
        %514 = vmatpush.msra.mxu0 0.0
        %515 = vmatpush.msra.mxu0 0.0
        %516 = vmatpush.msra.mxu0 0.0
        %517 = vmatpush.msra.mxu0 0.0
        %518 = vmatpush.msra.mxu0 0.0
        %519 = vmatpush.msra.mxu0 0.0
        %520 = vmatpush.msra.mxu0 %v493
        %521 = vmatpush.msra.mxu0 %v492
        %522 = vmatmul.f32.gmra.mxu0 %v495
        %v523 = vpop.f32.mrf.mxu0
        %v524 = vadd.f32 0.0, %v523
        %525 = vmatmul.f32.gmra.mxu0 %v498
        %v526 = vpop.f32.mrf.mxu0
        %v527 = vadd.f32 0.0, %v526
        %528 = vmatmul.f32.gmra.mxu0 %v501
        %v529 = vpop.f32.mrf.mxu0
        %v530 = vadd.f32 0.0, %v529
        %531 = vmatmul.f32.gmra.mxu0 %v504
        %v532 = vpop.f32.mrf.mxu0
        %v533 = vadd.f32 0.0, %v532
        %534 = vdwg.mxu0
        %v535 = vperm.slane %v218, 1
        %v536 = vmul.f32 %v524, %v535
        %v537 = vmul.f32 %v527, %v535
        %v538 = vmul.f32 %v530, %v535
        %v539 = vmul.f32 %v533, %v535
        %vm540 = vcmask 80896
        %v541 = vsel %vm540, %v536, 0.0
        %542 = vadd.xlane.f32.xlu0 %v541
        %v543 = vpop.xlane.xlu0 %542
        %v544 = vsel %vm540, %v537, 0.0
        %545 = vadd.xlane.f32.xlu0 %v544
        %v546 = vpop.xlane.xlu0 %545
        %v547 = vsel %vm540, %v538, 0.0
        %548 = vadd.xlane.f32.xlu0 %v547
        %v549 = vpop.xlane.xlu0 %548
        %v550 = vsel %vm540, %v539, 0.0
        %551 = vadd.xlane.f32.xlu0 %v550
        %v552 = vpop.xlane.xlu0 %551
        %v554 = vsel %vm540, %v218, 0
        %v557 = vsel %vm540, %v524, 0
        %v560 = vsel %vm540, %v527, 0
        %v563 = vsel %vm540, %v530, 0
        %v566 = vsel %vm540, %v533, 0
        %568 = vmatpush.xpose.msra.mxu0 0.0
        %569 = vmatpush.xpose.msra.mxu0 0.0
        %570 = vmatpush.xpose.msra.mxu0 0.0
        %571 = vmatpush.xpose.msra.mxu0 0.0
        %572 = vmatpush.xpose.msra.mxu0 0.0
        %573 = vmatpush.xpose.msra.mxu0 0.0
        %574 = vmatpush.xpose.msra.mxu0 0.0
        %575 = vmatpush.xpose.msra.mxu0 0.0
        %576 = vmatpush.xpose.msra.mxu0 0.0
        %577 = vmatpush.xpose.msra.mxu0 0.0
        %578 = vmatpush.xpose.msra.mxu0 0.0
        %579 = vmatpush.xpose.msra.mxu0 0.0
        %580 = vmatpush.xpose.msra.mxu0 %v566
        %581 = vmatpush.xpose.msra.mxu0 %v563
        %582 = vmatpush.xpose.msra.mxu0 %v560
        %583 = vmatpush.xpose.msra.mxu0 %v557
        %584 = vmatmul.f32.gmra.mxu0 %v554
        %v585 = vpop.f32.mrf.mxu0
        %v586 = vadd.f32 0.0, %v585
        %587 = vdwg.mxu0
        %v588 = vperm.slane %v586, 0
        %v589 = vadd.f32 %v543, %v588
        %v590 = vadd.f32 %v546, %v588
        %v591 = vadd.f32 %v549, %v588
        %v592 = vadd.f32 %v552, %v588
        %v593 = vmul.f32 %v589, 0.2
        %v594 = vmul.f32 %v590, 0.2
        %v595 = vmul.f32 %v591, 0.2
        %v596 = vmul.f32 %v592, 0.2
        %v597 = vmax.f32 %v589, %v593
        %v598 = vmax.f32 %v590, %v594
        %v599 = vmax.f32 %v591, %v595
        %v600 = vmax.f32 %v592, %v596
        %v601 = vadd.f32 %v597, %v333
        %v602 = vadd.f32 %v598, %v334
        %v603 = vadd.f32 %v599, %v335
        %v604 = vadd.f32 %v600, %v336
        %v605 = vsel %vm341, %v601, -inf
        %606 = vmax.xlane.f32.xlu0 %v605
        %v607 = vpop.xlane.xlu0 %606
        %v608 = vsel %vm341, %v602, -inf
        %609 = vmax.xlane.f32.xlu0 %v608
        %v610 = vpop.xlane.xlu0 %609
        %v611 = vsel %vm341, %v603, -inf
        %612 = vmax.xlane.f32.xlu0 %v611
        %v613 = vpop.xlane.xlu0 %612
        %v614 = vsel %vm341, %v604, -inf
        %615 = vmax.xlane.f32.xlu0 %v614
        %v616 = vpop.xlane.xlu0 %615
        %v617 = vsub.f32 %v601, %v607
        %v618 = vsub.f32 %v602, %v610
        %v619 = vsub.f32 %v603, %v613
        %v620 = vsub.f32 %v604, %v616
        %v621 = vmul.f32 %v617, 1.442695
        %v622 = vpow.pop %v621
        %v623 = vmul.f32 %v618, 1.442695
        %v624 = vpow.pop %v623
        %v625 = vmul.f32 %v619, 1.442695
        %v626 = vpow.pop %v625
        %v627 = vmul.f32 %v620, 1.442695
        %v628 = vpow.pop %v627
        %v629 = vsel %vm341, %v622, 0.0
        %630 = vadd.xlane.f32.xlu0 %v629
        %v631 = vpop.xlane.xlu0 %630
        %v632 = vsel %vm341, %v624, 0.0
        %633 = vadd.xlane.f32.xlu0 %v632
        %v634 = vpop.xlane.xlu0 %633
        %v635 = vsel %vm341, %v626, 0.0
        %636 = vadd.xlane.f32.xlu0 %v635
        %v637 = vpop.xlane.xlu0 %636
        %v638 = vsel %vm341, %v628, 0.0
        %639 = vadd.xlane.f32.xlu0 %v638
        %v640 = vpop.xlane.xlu0 %639
        %v642 = vsel %vm341, %v622, 0
        %v645 = vsel %vm341, %v624, 0
        %v648 = vsel %vm341, %v626, 0
        %v651 = vsel %vm341, %v628, 0
        %653 = vmatpush.msra.mxu0 0.0
        %654 = vmatpush.msra.mxu0 0.0
        %655 = vmatpush.msra.mxu0 0.0
        %656 = vmatpush.msra.mxu0 0.0
        %657 = vmatpush.msra.mxu0 0.0
        %658 = vmatpush.msra.mxu0 0.0
        %659 = vmatpush.msra.mxu0 0.0
        %660 = vmatpush.msra.mxu0 0.0
        %661 = vmatpush.msra.mxu0 0.0
        %662 = vmatpush.msra.mxu0 0.0
        %663 = vmatpush.msra.mxu0 0.0
        %664 = vmatpush.msra.mxu0 0.0
        %665 = vmatpush.msra.mxu0 %v533
        %666 = vmatpush.msra.mxu0 %v530
        %667 = vmatpush.msra.mxu0 %v527
        %668 = vmatpush.msra.mxu0 %v524
        %669 = vmatmul.f32.gmra.mxu0 %v642
        %v670 = vpop.f32.mrf.mxu0
        %v671 = vadd.f32 0.0, %v670
        %672 = vmatmul.f32.gmra.mxu0 %v645
        %v673 = vpop.f32.mrf.mxu0
        %v674 = vadd.f32 0.0, %v673
        %675 = vmatmul.f32.gmra.mxu0 %v648
        %v676 = vpop.f32.mrf.mxu0
        %v677 = vadd.f32 0.0, %v676
        %678 = vmatmul.f32.gmra.mxu0 %v651
        %v679 = vpop.f32.mrf.mxu0
        %v680 = vadd.f32 0.0, %v679
        %681 = vdwg.mxu0
        %v682 = vrcp.pop %v631
        %v683 = vmul.f32 %v631, %v682
        %v684 = vsub.f32 1.0, %v683
        %v685 = vmul.f32 %v682, %v684
        %v686 = vadd.f32 %v682, %v685
        %vm687 = vweird.f32 %v631
        %vm688 = vweird.f32 %v682
        %vm689 = vmor %vm687, %vm688
        %v690 = vsel %vm689, %v682, %v686
        %v691 = vand.u32 2147483647, %v631
        %vm692 = vcmp.eq.f32.partialorder %v691, 8.507059e+37
        %v693 = vand.u32 %v631, 2147483648
        %v694 = vor.u32 1.1754944e-38, %v693
        %v695 = vsel %vm692, %v694, %v690
        %v696 = vmul.f32 1.0, %v695
        %v697 = vrcp.pop %v634
        %v698 = vmul.f32 %v634, %v697
        %v699 = vsub.f32 1.0, %v698
        %v700 = vmul.f32 %v697, %v699
        %v701 = vadd.f32 %v697, %v700
        %vm702 = vweird.f32 %v634
        %vm703 = vweird.f32 %v697
        %vm704 = vmor %vm702, %vm703
        %v705 = vsel %vm704, %v697, %v701
        %v706 = vand.u32 2147483647, %v634
        %vm707 = vcmp.eq.f32.partialorder %v706, 8.507059e+37
        %v708 = vand.u32 %v634, 2147483648
        %v709 = vor.u32 1.1754944e-38, %v708
        %v710 = vsel %vm707, %v709, %v705
        %v711 = vmul.f32 1.0, %v710
        %v712 = vrcp.pop %v637
        %v713 = vmul.f32 %v637, %v712
        %v714 = vsub.f32 1.0, %v713
        %v715 = vmul.f32 %v712, %v714
        %v716 = vadd.f32 %v712, %v715
        %vm717 = vweird.f32 %v637
        %vm718 = vweird.f32 %v712
        %vm719 = vmor %vm717, %vm718
        %v720 = vsel %vm719, %v712, %v716
        %v721 = vand.u32 2147483647, %v637
        %vm722 = vcmp.eq.f32.partialorder %v721, 8.507059e+37
        %v723 = vand.u32 %v637, 2147483648
        %v724 = vor.u32 1.1754944e-38, %v723
        %v725 = vsel %vm722, %v724, %v720
        %v726 = vmul.f32 1.0, %v725
        %v727 = vrcp.pop %v640
        %v728 = vmul.f32 %v640, %v727
        %v729 = vsub.f32 1.0, %v728
        %v730 = vmul.f32 %v727, %v729
        %v731 = vadd.f32 %v727, %v730
        %vm732 = vweird.f32 %v640
        %vm733 = vweird.f32 %v727
        %vm734 = vmor %vm732, %vm733
        %v735 = vsel %vm734, %v727, %v731
        %v736 = vand.u32 2147483647, %v640
        %vm737 = vcmp.eq.f32.partialorder %v736, 8.507059e+37
        %v738 = vand.u32 %v640, 2147483648
        %v739 = vor.u32 1.1754944e-38, %v738
        %v740 = vsel %vm737, %v739, %v735
        %v741 = vmul.f32 1.0, %v740
        %v742 = vmul.f32 %v671, %v696
        %v743 = vmul.f32 %v674, %v711
        %v744 = vmul.f32 %v677, %v726
        %v745 = vmul.f32 %v680, %v741
        %v746 = vperm.slane %v218, 2
        %v747 = vadd.f32 %v742, %v746
        %v748 = vadd.f32 %v743, %v746
        %v749 = vadd.f32 %v744, %v746
        %v750 = vadd.f32 %v745, %v746
        %v751 = vld [vmem:[%s2 + $0x28] sm:$0xff]
        %v752 = vld [vmem:[%s2 + $0x30] sm:$0x3]
        %v753 = vperm.slane %v219, 0
        %v755 = vsel %vm540, %v747, 0
        %v758 = vsel %vm540, %v748, 0
        %v761 = vsel %vm540, %v749, 0
        %v764 = vsel %vm540, %v750, 0
        %vm766 = vcmask 1041408
        %v768 = vsel %vm766, %v752, 0
        %770 = vmatpush.msra.mxu0 0.0
        %771 = vmatpush.msra.mxu0 0.0
        %772 = vmatpush.msra.mxu0 0.0
        %773 = vmatpush.msra.mxu0 0.0
        %774 = vmatpush.msra.mxu0 0.0
        %775 = vmatpush.msra.mxu0 0.0
        %776 = vmatpush.msra.mxu0 0.0
        %777 = vmatpush.msra.mxu0 0.0
        %778 = vmatpush.msra.mxu0 0.0
        %779 = vmatpush.msra.mxu0 0.0
        %780 = vmatpush.msra.mxu0 0.0
        %781 = vmatpush.msra.mxu0 0.0
        %782 = vmatpush.msra.mxu0 0.0
        %783 = vmatpush.msra.mxu0 0.0
        %784 = vmatpush.msra.mxu0 %v768
        %785 = vmatpush.msra.mxu0 %v751
        %786 = vmatmul.f32.gmra.mxu0 %v755
        %v787 = vpop.f32.mrf.mxu0
        %v788 = vadd.f32 %v753, %v787
        %789 = vmatmul.f32.gmra.mxu0 %v758
        %v790 = vpop.f32.mrf.mxu0
        %v791 = vadd.f32 %v753, %v790
        %792 = vmatmul.f32.gmra.mxu0 %v761
        %v793 = vpop.f32.mrf.mxu0
        %v794 = vadd.f32 %v753, %v793
        %795 = vmatmul.f32.gmra.mxu0 %v764
        %v796 = vpop.f32.mrf.mxu0
        %v797 = vadd.f32 %v753, %v796
        %798 = vdwg.mxu0
        %v799 = vmax.f32 %v788, 0.0
        %v800 = vmax.f32 %v791, 0.0
        %v801 = vmax.f32 %v794, 0.0
        %v802 = vmax.f32 %v797, 0.0
        %v803 = vperm.slane %v219, 1
        %v804 = vmul.f32 %v799, %v803
        %v805 = vmul.f32 %v800, %v803
        %v806 = vmul.f32 %v801, %v803
        %v807 = vmul.f32 %v802, %v803
        %v808 = vsel %vm540, %v804, 0.0
        %809 = vadd.xlane.f32.xlu0 %v808
        %v810 = vpop.xlane.xlu0 %809
        %v811 = vsel %vm540, %v805, 0.0
        %812 = vadd.xlane.f32.xlu0 %v811
        %v813 = vpop.xlane.xlu0 %812
        %v814 = vsel %vm540, %v806, 0.0
        %815 = vadd.xlane.f32.xlu0 %v814
        %v816 = vpop.xlane.xlu0 %815
        %v817 = vsel %vm540, %v807, 0.0
        %818 = vadd.xlane.f32.xlu0 %v817
        %v819 = vpop.xlane.xlu0 %818
        %v820 = vperm.slane %v219, 2
        %v821 = vadd.f32 %v810, %v820
        %v822 = vadd.f32 %v813, %v820
        %v823 = vadd.f32 %v816, %v820
        %v824 = vadd.f32 %v819, %v820
        %826 = vset.pattern.permute.xlu0 0
        %827 = vperm.xlu0 %826, %v821
        %v828 = vpop.permute.xlu0 %827
        %831 = vset.pattern.permute.xlu0 0
        %832 = vperm.xlu0 %831, %v822
        %v833 = vpop.permute.xlu0 %832
        %836 = vset.pattern.permute.xlu0 0
        %837 = vperm.xlu0 %836, %v823
        %v838 = vpop.permute.xlu0 %837
        %841 = vset.pattern.permute.xlu0 0
        %842 = vperm.xlu0 %841, %v824
        %v843 = vpop.permute.xlu0 %842
        %845 = vst [vmem:[%s212] sm:$0xff] %v828
        %846 = vst [vmem:[%s212 + $0x8] sm:$0xff] %v833
        %847 = vst [vmem:[%s212 + $0x10] sm:$0xff] %v838
        %848 = vst [vmem:[%s212 + $0x18] sm:$0xff] %v843
        %p849 = scmp.lt.s32.totalorder %s17, 1
        %s850 = scalar_select %p849, %s17, 1
        %s851 = smul.addr %s850, 4
        %s852 = smul.addr %s851, 8
        %s853 = scalar_lea.vmem %s3, %s852
        // Predicated region
        $region37: #{forward.1} parent=31 // pred_check
          %p854 = pneg %p108
        $region38: #{forward.1} parent=31 // pred_check_branch
          %856 = sbr.rel (%p854) target = $region40
        $region39: #{forward.1} parent=31 // pred_region
          _
        $region40: #{forward.1} parent=31 // pred_fallthru
          _
      $region32: #{forward.1} parent=5 // pred_fallthru
        _
      %p857 = scmp.le.s32.totalorder 2, %s12
      // Predicated region
      $region41: #{forward.1} parent=5 // pred_check
        %p858 = pneg %p857
      $region42: #{forward.1} parent=5 // pred_check_branch
        %860 = sbr.rel (%p858) target = $region44
      $region43: #{forward.1} parent=5 // pred_region
        %s861 = ssub.s32 %s12, 2
        // Predicated region
        $region45: #{forward.1} parent=43 // pred_check
          %p862 = pneg %p114
        $region46: #{forward.1} parent=43 // pred_check_branch
          %864 = sbr.rel (%p862) target = $region48
        $region47: #{forward.1} parent=43 // pred_region
          %p865 = scmp.lt.s32.totalorder %s18, 1
          %s866 = scalar_select %p865, %s18, 1
          %s867 = smul.addr %s866, 4
          %s868 = smul.addr %s867, 8
          %s869 = scalar_lea.vmem %s3, %s868
        $region48: #{forward.1} parent=43 // pred_fallthru
          _
      $region44: #{forward.1} parent=5 // pred_fallthru
        _
    $region6: #{forward.1} parent=1 // loop_footer
      %s16 = sadd.s32 1, %s12
    $region7: #{forward.1} parent=1 // loop_footer_branch
      %11 = sbr.rel target = $region3
    $region8: #{forward.1} parent=1 // loop_exit
      _
    %870 = vsyncpa [#allocation3], 1
    %s871 = scalar_lea.sflag [#allocation3], 1
    %872 = vsyncpa %s871, 1

</llo_original>
